<compile_context>
chip_gen: v5e
topology: v5e:2x2
jax: 0.10.0
libtpu: 0.0.40
codegen_flags: <defaults>
</compile_context>

<pallas_src>
import functools

import jax
import jax.numpy as jnp
from jax.experimental import pallas as pl
from jax.experimental.pallas import tpu as pltpu

IGNORE_LABEL = 255


def _round_up(x, m):
    return ((x + m - 1) // m) * m


def _ce_kernel(logits_ref, label_ref, out_ref, *, ignore_label, num_rows):
    """logits_ref: (1, C, TP, 128); label_ref: (1, 1, TP, 128);
    out_ref: (1, 1, 2, 128) f32 partials."""
    c = logits_ref.shape[1]
    tp = logits_ref.shape[2]

    lab = label_ref[0, 0]  # (TP, 128), native label dtype

    if c <= 32:
        # Unrolled over the (small, static) class axis: running max in the
        # input dtype (packed bf16 on v6e/v7x), f32 only for exp / lse.
        def row(k):
            return logits_ref[0, k]  # (TP, 128), native dtype

        m = row(0)
        for k in range(1, c):
            m = jnp.maximum(m, row(k))
        m_f = m.astype(jnp.float32)

        e_sum = jnp.zeros((tp, 128), jnp.float32)
        tgt = jnp.zeros((tp, 128), jnp.float32)
        for k in range(c):
            r = row(k)
            e_sum = e_sum + jnp.exp(r.astype(jnp.float32) - m_f)
            tgt = jnp.where(lab == k, r.astype(jnp.float32), tgt)
    else:
        # Large class count: loop over classes, never materialize a full
        # (C, TP, 128) f32 copy in VMEM.
        def max_body(k, m):
            return jnp.maximum(m, logits_ref[0, k])

        m = jax.lax.fori_loop(1, c, max_body, logits_ref[0, 0])
        m_f = m.astype(jnp.float32)

        def acc_body(k, carry):
            e_sum, tgt = carry
            r = logits_ref[0, k]
            e_sum = e_sum + jnp.exp(r.astype(jnp.float32) - m_f)
            tgt = jnp.where(lab == k, r.astype(jnp.float32), tgt)
            return e_sum, tgt

        e_sum, tgt = jax.lax.fori_loop(
            0, c, acc_body,
            (jnp.zeros((tp, 128), jnp.float32),
             jnp.zeros((tp, 128), jnp.float32)))

    lse = jnp.log(e_sum) + m_f  # (TP, 128)

    # Valid = not ignore_label; only mask stale rows of a partial last tile
    # when a tail actually exists (static check, free in the common case).
    valid = lab != ignore_label
    if num_rows % tp != 0:
        j = pl.program_id(1)
        grow = j * tp + jax.lax.broadcasted_iota(jnp.int32, (tp, 128), 0)
        valid = jnp.logical_and(valid, grow < num_rows)

    loss = jnp.where(valid, lse - tgt, 0.0)  # (TP, 128)
    cnt = jnp.where(valid, 1.0, 0.0)         # (TP, 128)

    # Per-lane partial sums (sublane reduce only); full reduction done in JAX.
    loss_l = jnp.sum(loss, axis=0, keepdims=True)  # (1, 128)
    cnt_l = jnp.sum(cnt, axis=0, keepdims=True)    # (1, 128)

    row_i = jax.lax.broadcasted_iota(jnp.int32, (2, 128), 0)
    out_ref[0, 0] = jnp.where(row_i == 0,
                              jnp.broadcast_to(loss_l, (2, 128)),
                              jnp.broadcast_to(cnt_l, (2, 128)))


def pixel_loss(prediction, label, ignore_label=IGNORE_LABEL,
               target_block_bytes=2 * 1024 * 1024):
    """prediction: (N, C, H, W) float; label: (N, 1, H, W) int -> scalar mean CE."""
    n, c, h, w = prediction.shape
    hw = h * w

    # Dense (sublane, 128) pixel layout.  When HW % 128 == 0 this is a free,
    # contiguous reshape; otherwise lane-pad once (padded pixels get
    # ignore_label and are masked out in-kernel).
    hw_pad = _round_up(hw, 128)
    logits = prediction.reshape(n, c, hw)
    labels = label.reshape(n, 1, hw)  # keep native label dtype (no int32 upcast)
    if hw_pad != hw:
        logits = jnp.pad(logits, ((0, 0), (0, 0), (0, hw_pad - hw)))
        labels = jnp.pad(labels, ((0, 0), (0, 0), (0, hw_pad - hw)),
                         constant_values=ignore_label)
    num_rows = hw_pad // 128
    logits = logits.reshape(n, c, num_rows, 128)
    labels = labels.reshape(n, 1, num_rows, 128)

    # Pick a sublane-granular pixel-row tile: ~target_block_bytes of logits,
    # a multiple of 8 rows (unless it covers the whole axis), and enough grid
    # steps that v7x's two TensorCores both get work.
    itemsize = jnp.dtype(prediction.dtype).itemsize
    target_rows = max(8, target_block_bytes // (c * 128 * itemsize))
    if num_rows <= 8:
        tp = num_rows  # single full-extent block along the sublane axis
    else:
        tp = min(num_rows, target_rows)
        tp = max((tp // 8) * 8, 8)
        while tp > 8 and n * (-(-num_rows // tp)) < 4:
            tp = max(((tp // 2) // 8) * 8, 8)
    num_tiles = -(-num_rows // tp)

    kernel = functools.partial(_ce_kernel, ignore_label=ignore_label,
                               num_rows=num_rows)

    partials = pl.pallas_call(
        kernel,
        out_shape=jax.ShapeDtypeStruct((n, num_tiles, 2, 128), jnp.float32),
        grid_spec=pltpu.PrefetchScalarGridSpec(
            num_scalar_prefetch=0,
            grid=(n, num_tiles),
            in_specs=[
                pl.BlockSpec((1, c, tp, 128), lambda b, j: (b, 0, j, 0)),
                pl.BlockSpec((1, 1, tp, 128), lambda b, j: (b, 0, j, 0)),
            ],
            out_specs=pl.BlockSpec((1, 1, 2, 128), lambda b, j: (b, j, 0, 0)),
        ),
        compiler_params=pltpu.CompilerParams(
            dimension_semantics=("parallel", "parallel"),
            vmem_limit_bytes=32 * 1024 * 1024,
        ),
    )(logits, labels)

    loss_sum = jnp.sum(partials[:, :, 0, :])
    count = jnp.sum(partials[:, :, 1, :])
    # Mean over valid pixels (NaN if no valid pixel, matching torch CE).
    return loss_sum / count


def _ref_pixel_loss(prediction, label, ignore_label=IGNORE_LABEL):
    # pure-JAX reference for a sanity check
    n, c, h, w = prediction.shape
    logits = jnp.transpose(prediction.astype(jnp.float32), (0, 2, 3, 1)).reshape(-1, c)
    labels = label.reshape(-1).astype(jnp.int32)
    valid = labels != ignore_label
    safe = jnp.where(valid, labels, 0)
    logp = jax.nn.log_softmax(logits, axis=-1)
    nll = -jnp.take_along_axis(logp, safe[:, None], axis=1)[:, 0]
    nll = jnp.where(valid, nll, 0.0)
    return jnp.sum(nll) / jnp.sum(valid.astype(jnp.float32))


if __name__ == "__main__":
    key = jax.random.PRNGKey(0)
    k1, k2, k3 = jax.random.split(key, 3)

    N, C, H, W = 2, 4, 16, 16
    prediction = jax.random.normal(k1, (N, C, H, W), dtype=jnp.float32)
    label = jax.random.randint(k2, (N, 1, H, W), 0, C, dtype=jnp.int32)
    # sprinkle in some ignored pixels
    ignore_mask = jax.random.bernoulli(k3, 0.1, (N, 1, H, W))
    label = jnp.where(ignore_mask, IGNORE_LABEL, label)

    loss = pixel_loss(prediction, label)
    jax.block_until_ready(loss)

    ref = _ref_pixel_loss(prediction, label)
    assert jnp.allclose(loss, ref, rtol=1e-5, atol=1e-5), (loss, ref)

    print("KERNEL_OK")
</pallas_src>

<mosaic_0001>
module attributes {stable_mosaic.version = 11 : i64} {
  func.func @_ce_kernel(%arg0: i32, %arg1: i32, %arg2: memref<1x4x2x128xf32, #tpu.memory_space<vmem>>, %arg3: memref<1x1x2x128xi32, #tpu.memory_space<vmem>>, %arg4: memref<1x1x2x128xf32, #tpu.memory_space<vmem>>) attributes {dimension_semantics = [#tpu.dimension_semantics<parallel>, #tpu.dimension_semantics<parallel>], iteration_bounds = array<i64: 2, 1>, scalar_prefetch = 0 : i64, scratch_operands = 0 : i64, tpu.core_type = #tpu.core_type<tc>, window_params = [{transform_indices = @transform_0, window_bounds = array<i64: 1, 4, 2, 128>}, {transform_indices = @transform_1, window_bounds = array<i64: 1, 1, 2, 128>}, {transform_indices = @transform_2, window_bounds = array<i64: 1, 1, 2, 128>}]} {
    %c0 = arith.constant 0 : index
    %c0_0 = arith.constant 0 : index
    %c0_1 = arith.constant 0 : index
    %c0_2 = arith.constant 0 : index
    %0 = vector.load %arg3[%c0, %c0_0, %c0_1, %c0_2] : memref<1x1x2x128xi32, #tpu.memory_space<vmem>>, vector<1x1x2x128xi32>
    %1 = vector.shape_cast %0 : vector<1x1x2x128xi32> to vector<2x128xi32>
    %c0_3 = arith.constant 0 : index
    %c0_4 = arith.constant 0 : index
    %c0_5 = arith.constant 0 : index
    %c0_6 = arith.constant 0 : index
    %2 = vector.load %arg2[%c0_3, %c0_4, %c0_5, %c0_6] : memref<1x4x2x128xf32, #tpu.memory_space<vmem>>, vector<1x1x2x128xf32>
    %3 = vector.shape_cast %2 : vector<1x1x2x128xf32> to vector<2x128xf32>
    %c0_7 = arith.constant 0 : index
    %c1 = arith.constant 1 : index
    %c0_8 = arith.constant 0 : index
    %c0_9 = arith.constant 0 : index
    %4 = vector.load %arg2[%c0_7, %c1, %c0_8, %c0_9] : memref<1x4x2x128xf32, #tpu.memory_space<vmem>>, vector<1x1x2x128xf32>
    %5 = vector.shape_cast %4 : vector<1x1x2x128xf32> to vector<2x128xf32>
    %6 = arith.maximumf %3, %5 : vector<2x128xf32>
    %c0_10 = arith.constant 0 : index
    %c2 = arith.constant 2 : index
    %c0_11 = arith.constant 0 : index
    %c0_12 = arith.constant 0 : index
    %7 = vector.load %arg2[%c0_10, %c2, %c0_11, %c0_12] : memref<1x4x2x128xf32, #tpu.memory_space<vmem>>, vector<1x1x2x128xf32>
    %8 = vector.shape_cast %7 : vector<1x1x2x128xf32> to vector<2x128xf32>
    %9 = arith.maximumf %6, %8 : vector<2x128xf32>
    %c0_13 = arith.constant 0 : index
    %c3 = arith.constant 3 : index
    %c0_14 = arith.constant 0 : index
    %c0_15 = arith.constant 0 : index
    %10 = vector.load %arg2[%c0_13, %c3, %c0_14, %c0_15] : memref<1x4x2x128xf32, #tpu.memory_space<vmem>>, vector<1x1x2x128xf32>
    %11 = vector.shape_cast %10 : vector<1x1x2x128xf32> to vector<2x128xf32>
    %12 = arith.maximumf %9, %11 : vector<2x128xf32>
    %cst = arith.constant 0.000000e+00 : f32
    %13 = vector.broadcast %cst : f32 to vector<2x128xf32>
    %cst_16 = arith.constant 0.000000e+00 : f32
    %14 = vector.broadcast %cst_16 : f32 to vector<2x128xf32>
    %c0_17 = arith.constant 0 : index
    %c0_18 = arith.constant 0 : index
    %c0_19 = arith.constant 0 : index
    %c0_20 = arith.constant 0 : index
    %15 = vector.load %arg2[%c0_17, %c0_18, %c0_19, %c0_20] : memref<1x4x2x128xf32, #tpu.memory_space<vmem>>, vector<1x1x2x128xf32>
    %16 = vector.shape_cast %15 : vector<1x1x2x128xf32> to vector<2x128xf32>
    %17 = arith.subf %16, %12 : vector<2x128xf32>
    %18 = math.exp %17 : vector<2x128xf32>
    %19 = arith.addf %13, %18 : vector<2x128xf32>
    %c0_i32 = arith.constant 0 : i32
    %20 = vector.broadcast %c0_i32 : i32 to vector<2x128xi32>
    %21 = arith.cmpi eq, %1, %20 : vector<2x128xi32>
    %22 = arith.select %21, %16, %14 : vector<2x128xi1>, vector<2x128xf32>
    %c0_21 = arith.constant 0 : index
    %c1_22 = arith.constant 1 : index
    %c0_23 = arith.constant 0 : index
    %c0_24 = arith.constant 0 : index
    %23 = vector.load %arg2[%c0_21, %c1_22, %c0_23, %c0_24] : memref<1x4x2x128xf32, #tpu.memory_space<vmem>>, vector<1x1x2x128xf32>
    %24 = vector.shape_cast %23 : vector<1x1x2x128xf32> to vector<2x128xf32>
    %25 = arith.subf %24, %12 : vector<2x128xf32>
    %26 = math.exp %25 : vector<2x128xf32>
    %27 = arith.addf %19, %26 : vector<2x128xf32>
    %c1_i32 = arith.constant 1 : i32
    %28 = vector.broadcast %c1_i32 : i32 to vector<2x128xi32>
    %29 = arith.cmpi eq, %1, %28 : vector<2x128xi32>
    %30 = arith.select %29, %24, %22 : vector<2x128xi1>, vector<2x128xf32>
    %c0_25 = arith.constant 0 : index
    %c2_26 = arith.constant 2 : index
    %c0_27 = arith.constant 0 : index
    %c0_28 = arith.constant 0 : index
    %31 = vector.load %arg2[%c0_25, %c2_26, %c0_27, %c0_28] : memref<1x4x2x128xf32, #tpu.memory_space<vmem>>, vector<1x1x2x128xf32>
    %32 = vector.shape_cast %31 : vector<1x1x2x128xf32> to vector<2x128xf32>
    %33 = arith.subf %32, %12 : vector<2x128xf32>
    %34 = math.exp %33 : vector<2x128xf32>
    %35 = arith.addf %27, %34 : vector<2x128xf32>
    %c2_i32 = arith.constant 2 : i32
    %36 = vector.broadcast %c2_i32 : i32 to vector<2x128xi32>
    %37 = arith.cmpi eq, %1, %36 : vector<2x128xi32>
    %38 = arith.select %37, %32, %30 : vector<2x128xi1>, vector<2x128xf32>
    %c0_29 = arith.constant 0 : index
    %c3_30 = arith.constant 3 : index
    %c0_31 = arith.constant 0 : index
    %c0_32 = arith.constant 0 : index
    %39 = vector.load %arg2[%c0_29, %c3_30, %c0_31, %c0_32] : memref<1x4x2x128xf32, #tpu.memory_space<vmem>>, vector<1x1x2x128xf32>
    %40 = vector.shape_cast %39 : vector<1x1x2x128xf32> to vector<2x128xf32>
    %41 = arith.subf %40, %12 : vector<2x128xf32>
    %42 = math.exp %41 : vector<2x128xf32>
    %43 = arith.addf %35, %42 : vector<2x128xf32>
    %c3_i32 = arith.constant 3 : i32
    %44 = vector.broadcast %c3_i32 : i32 to vector<2x128xi32>
    %45 = arith.cmpi eq, %1, %44 : vector<2x128xi32>
    %46 = arith.select %45, %40, %38 : vector<2x128xi1>, vector<2x128xf32>
    %47 = math.log %43 : vector<2x128xf32>
    %48 = arith.addf %47, %12 : vector<2x128xf32>
    %c255_i32 = arith.constant 255 : i32
    %49 = vector.broadcast %c255_i32 : i32 to vector<2x128xi32>
    %50 = arith.cmpi ne, %1, %49 : vector<2x128xi32>
    %51 = arith.subf %48, %46 : vector<2x128xf32>
    %cst_33 = arith.constant 0.000000e+00 : f32
    %52 = vector.broadcast %cst_33 : f32 to vector<2x128xf32>
    %53 = arith.select %50, %51, %52 : vector<2x128xi1>, vector<2x128xf32>
    %cst_34 = arith.constant 1.000000e+00 : f32
    %cst_35 = arith.constant 0.000000e+00 : f32
    %54 = vector.broadcast %cst_34 : f32 to vector<2x128xf32>
    %55 = vector.broadcast %cst_35 : f32 to vector<2x128xf32>
    %56 = arith.select %50, %54, %55 : vector<2x128xi1>, vector<2x128xf32>
    %cst_36 = arith.constant dense<0.000000e+00> : vector<128xf32>
    %57 = vector.multi_reduction <add>, %53, %cst_36 [0] : vector<2x128xf32> to vector<128xf32>
    %58 = vector.shape_cast %57 : vector<128xf32> to vector<1x128xf32>
    %cst_37 = arith.constant dense<0.000000e+00> : vector<128xf32>
    %59 = vector.multi_reduction <add>, %56, %cst_37 [0] : vector<2x128xf32> to vector<128xf32>
    %60 = vector.shape_cast %59 : vector<128xf32> to vector<1x128xf32>
    %61 = tpu.iota {dimensions = array<i32: 0>} : vector<2x128xi32>
    %c0_i32_38 = arith.constant 0 : i32
    %62 = vector.broadcast %c0_i32_38 : i32 to vector<2x128xi32>
    %63 = arith.cmpi eq, %61, %62 : vector<2x128xi32>
    %64 = vector.shape_cast %58 : vector<1x128xf32> to vector<1x128xf32>
    %65 = vector.broadcast %64 : vector<1x128xf32> to vector<2x128xf32>
    %66 = vector.shape_cast %60 : vector<1x128xf32> to vector<1x128xf32>
    %67 = vector.broadcast %66 : vector<1x128xf32> to vector<2x128xf32>
    %68 = arith.select %63, %65, %67 : vector<2x128xi1>, vector<2x128xf32>
    %c0_39 = arith.constant 0 : index
    %c0_40 = arith.constant 0 : index
    %c0_41 = arith.constant 0 : index
    %c0_42 = arith.constant 0 : index
    %69 = vector.load %arg4[%c0_39, %c0_40, %c0_41, %c0_42] : memref<1x1x2x128xf32, #tpu.memory_space<vmem>>, vector<1x1x2x128xf32>
    %70 = vector.shape_cast %69 : vector<1x1x2x128xf32> to vector<2x128xf32>
    %71 = vector.shape_cast %68 : vector<2x128xf32> to vector<1x1x2x128xf32>
    tpu.vector_store %arg4[%c0_39, %c0_40, %c0_41, %c0_42], %71 {strides = array<i32>} : memref<1x1x2x128xf32, #tpu.memory_space<vmem>>, vector<1x1x2x128xf32>,
    return
  }
  func.func @transform_0(%arg0: i32, %arg1: i32) -> (i32, i32, i32, i32) {
    %c0_i32 = arith.constant 0 : i32
    %c0_i32_0 = arith.constant 0 : i32
    %c0_i32_1 = arith.constant 0 : i32
    return %arg0, %c0_i32, %arg1, %c0_i32_0 : i32, i32, i32, i32
  }
  func.func @transform_1(%arg0: i32, %arg1: i32) -> (i32, i32, i32, i32) {
    %c0_i32 = arith.constant 0 : i32
    %c0_i32_0 = arith.constant 0 : i32
    %c0_i32_1 = arith.constant 0 : i32
    return %arg0, %c0_i32, %arg1, %c0_i32_0 : i32, i32, i32, i32
  }
  func.func @transform_2(%arg0: i32, %arg1: i32) -> (i32, i32, i32, i32) {
    %c0_i32 = arith.constant 0 : i32
    %c0_i32_0 = arith.constant 0 : i32
    %c0_i32_1 = arith.constant 0 : i32
    return %arg0, %arg1, %c0_i32, %c0_i32_0 : i32, i32, i32, i32
  }
}

</mosaic_0001>

<llo_original>
// kernel: tpu_custom_call.1
$region0: #{tpu_custom_call.1}
  #allocation0 [shape = 'u32[]', space=smem, size = 0x4, offset = 0x4, fixed_abs, tag = 'smem constant byte address 0x4 - core index']
  #allocation1 [shape = 'u32[72,128]{1,0:T(1,128)}', space=vmem, size = 0x9000, scoped, tag = 'internal scratch']
  %s0 = inlined_call_operand.hbm [shape: f32[2,4,2,128], index: 0, kind: input, shape index: {}]
  %s1 = inlined_call_operand.hbm [shape: s32[2,1,2,128], index: 1, kind: input, shape index: {}]
  %s2 = inlined_call_operand.hbm [shape: f32[2,1,2,128], index: 2, kind: output, shape index: {}]
  %s3 = sld [smem:[#allocation0]]
  $region49: #{tpu_custom_call.1} parent=0
    _
  %s5 = ssub.s32 1, %s3
  %s6 = scalar_select 0, %s5, %s3
  $region1: #{tpu_custom_call.1} parent=0
    #allocation2 [shape = 'u8[8192]{0}', space=vmem, size = 0x2000, scoped, tag = 'input window, operand 0']
    #allocation3 [shape = 's32[2]{0}', space=sflag, size = 0x8, scoped, tag = 'scoped memory for tpu_custom_call.1']
    #allocation4 [shape = 's32[2]{0}', space=sflag, size = 0x8, scoped, tag = 'scoped memory for tpu_custom_call.1']
    #allocation5 [shape = 'u8[2048]{0}', space=vmem, size = 0x800, scoped, tag = 'input window, operand 1']
    #allocation6 [shape = 's32[2]{0}', space=sflag, size = 0x8, scoped, tag = 'scoped memory for tpu_custom_call.1']
    #allocation7 [shape = 'u8[2048]{0}', space=vmem, size = 0x800, scoped, tag = 'output window, operand 0']
    %7 = vsyncpa [#allocation3], 0
    %s8 = scalar_lea.sflag [#allocation3], 1
    %9 = vsyncpa %s8, 0
    %10 = vsyncpa [#allocation6], 0
    %s11 = scalar_lea.sflag [#allocation6], 1
    %12 = vsyncpa %s11, 0
    %13 = vsyncpa [#allocation4], 0
    %s14 = scalar_lea.sflag [#allocation4], 1
    %15 = vsyncpa %s14, 0
    loop: start=0, step=1, limit=4
    $region2: #{tpu_custom_call.1} parent=1 // loop_pre_header
      _
    $region3: #{tpu_custom_call.1} parent=1 // loop_header
      %s17 = sphi 0, %s21
      %p18 = scmp.ge.s32.totalorder %s17, 4
      %s24 = sphi 0, %s36
      %s25 = sphi 0, %s32
      %s26 = sphi 0, %s24
      %s27 = sphi 0, %s25
      %s28 = sphi 0, %s26
      %s29 = sphi 0, %s27
      %s41 = sphi 0, %s43
      %s44 = sphi 0, %s41
      %s45 = sphi 0, %s44
      %s61 = sphi 0, %s45
      %s69 = sphi 0, %s71
      %s72 = sphi 0, %s69
      %s73 = sphi 0, %s72
      %s89 = sphi 0, %s73
      %s97 = sphi 0, %s99
      %s100 = sphi 0, %s97
      %s101 = sphi 0, %s100
      %s117 = sphi 0, %s101
    $region4: #{tpu_custom_call.1} parent=1 // loop_header_branch
      %20 = sbr.rel (%p18) target = $region8
    $region5: #{tpu_custom_call.1} parent=1 // loop_body
      %s22 = ssub.s32 %s17, 1
      %s23 = ssub.s32 %s17, 2
      %s30 = sadd.s32 1, %s25
      %p31 = scmp.ge.s32.totalorder %s30, 1
      %s32 = scalar_select %p31, 0, %s30
      %s33 = sadd.s32 1, %s24
      %s34 = scalar_select %p31, %s33, %s24
      %p35 = scmp.ge.s32.totalorder %s34, 2
      %s36 = scalar_select %p35, 0, %s34
      %s37 = ssub.s32 %s24, %s36
      %s38 = ssub.s32 %s25, %s32
      %s39 = sor.u32 %s37, %s38
      %p40 = scmp.eq.s32.totalorder %s39, 0
      %s42 = sadd.s32 %s41, 1
      %s43 = scalar_select %p40, %s41, %s42
      %p46 = pneg %p40
      %p47 = scmp.eq.s32.totalorder %s17, 1
      %p48 = por %p46, %p47
      %p49 = scmp.ne.s32.totalorder %s41, %s44
      %p50 = scmp.eq.s32.totalorder %s17, 0
      %p51 = por %p49, %p50
      %p52 = scmp.ne.s32.totalorder %s41, %s44
      %p53 = scmp.eq.s32.totalorder %s22, 1
      %p54 = por %p52, %p53
      %p55 = scmp.ne.s32.totalorder %s44, %s45
      %p56 = scmp.eq.s32.totalorder %s22, 0
      %p57 = por %p55, %p56
      %p58 = scmp.ne.s32.totalorder %s44, %s45
      %p59 = scmp.eq.s32.totalorder %s23, 1
      %p60 = por %p58, %p59
      %p62 = scmp.ne.s32.totalorder %s45, %s61
      %p63 = scmp.eq.s32.totalorder %s23, 0
      %p64 = por %p62, %p63
      %s65 = ssub.s32 %s24, %s36
      %s66 = ssub.s32 %s25, %s32
      %s67 = sor.u32 %s65, %s66
      %p68 = scmp.eq.s32.totalorder %s67, 0
      %s70 = sadd.s32 %s69, 1
      %s71 = scalar_select %p68, %s69, %s70
      %p74 = pneg %p68
      %p75 = scmp.eq.s32.totalorder %s17, 1
      %p76 = por %p74, %p75
      %p77 = scmp.ne.s32.totalorder %s69, %s72
      %p78 = scmp.eq.s32.totalorder %s17, 0
      %p79 = por %p77, %p78
      %p80 = scmp.ne.s32.totalorder %s69, %s72
      %p81 = scmp.eq.s32.totalorder %s22, 1
      %p82 = por %p80, %p81
      %p83 = scmp.ne.s32.totalorder %s72, %s73
      %p84 = scmp.eq.s32.totalorder %s22, 0
      %p85 = por %p83, %p84
      %p86 = scmp.ne.s32.totalorder %s72, %s73
      %p87 = scmp.eq.s32.totalorder %s23, 1
      %p88 = por %p86, %p87
      %p90 = scmp.ne.s32.totalorder %s73, %s89
      %p91 = scmp.eq.s32.totalorder %s23, 0
      %p92 = por %p90, %p91
      %s93 = ssub.s32 %s24, %s36
      %s94 = ssub.s32 %s25, %s32
      %s95 = sor.u32 %s93, %s94
      %p96 = scmp.eq.s32.totalorder %s95, 0
      %s98 = sadd.s32 %s97, 1
      %s99 = scalar_select %p96, %s97, %s98
      %p102 = pneg %p96
      %p103 = scmp.eq.s32.totalorder %s17, 1
      %p104 = por %p102, %p103
      %p105 = scmp.ne.s32.totalorder %s97, %s100
      %p106 = scmp.eq.s32.totalorder %s17, 0
      %p107 = por %p105, %p106
      %p108 = scmp.ne.s32.totalorder %s97, %s100
      %p109 = scmp.eq.s32.totalorder %s22, 1
      %p110 = por %p108, %p109
      %p111 = scmp.ne.s32.totalorder %s100, %s101
      %p112 = scmp.eq.s32.totalorder %s22, 0
      %p113 = por %p111, %p112
      %p114 = scmp.ne.s32.totalorder %s100, %s101
      %p115 = scmp.eq.s32.totalorder %s23, 1
      %p116 = por %p114, %p115
      %p118 = scmp.ne.s32.totalorder %s101, %s117
      %p119 = scmp.eq.s32.totalorder %s23, 0
      %p120 = por %p118, %p119
      %p121 = scmp.le.s32.totalorder 1, %s17
      %p122 = scmp.lt.s32.totalorder %s17, 3
      %p123 = pnand %p121, %p122
      %p124 = pneg %p123
      // Predicated region
      $region9: #{tpu_custom_call.1} parent=5 // pred_check
        _
      $region10: #{tpu_custom_call.1} parent=5 // pred_check_branch
        %126 = sbr.rel (%p123) target = $region12
      $region11: #{tpu_custom_call.1} parent=5 // pred_region
        %s127 = ssub.s32 %s17, 1
      $region12: #{tpu_custom_call.1} parent=5 // pred_fallthru
        _
      %p128 = scmp.lt.s32.totalorder %s17, 2
      // Predicated region
      $region13: #{tpu_custom_call.1} parent=5 // pred_check
        %p129 = pneg %p128
      $region14: #{tpu_custom_call.1} parent=5 // pred_check_branch
        %131 = sbr.rel (%p129) target = $region16
      $region15: #{tpu_custom_call.1} parent=5 // pred_region
        // Predicated region
        $region17: #{tpu_custom_call.1} parent=15 // pred_check
          %p132 = pneg %p51
        $region18: #{tpu_custom_call.1} parent=15 // pred_check_branch
          %134 = sbr.rel (%p132) target = $region20
        $region19: #{tpu_custom_call.1} parent=15 // pred_region
          %s135 = sand.u32 %s41, 1
          %s136 = scalar_lea.sflag [#allocation3], %s135
          %s137 = sand.u32 %s41, 1
          %s138 = smul.addr %s137, 8
          %s139 = scalar_lea.vmem [#allocation2], %s138
          %141 = vsyncadd %s136, 0
          %s142 = smul.addr %s24, 4
          %s143 = sadd.s32 %s25, %s142
          %s144 = smul.addr %s143, 2
          %s145 = scalar_lea.hbm %s0, %s144
          %s146 = sshll.u32 %s145, 4
          %s147 = int_to_ptr.hbm [resolvable:$true] %s146
          %s148 = sshll.u32 %s139, 4
          %s149 = int_to_ptr.vmem [resolvable:$true] %s148
          %154 = dma.hbm_to_vmem [thread:$0]  %s147, 128, %s149, %s136, 32, 32, 2
        $region20: #{tpu_custom_call.1} parent=15 // pred_fallthru
          _
        // Predicated region
        $region21: #{tpu_custom_call.1} parent=15 // pred_check
          %p155 = pneg %p79
        $region22: #{tpu_custom_call.1} parent=15 // pred_check_branch
          %157 = sbr.rel (%p155) target = $region24
        $region23: #{tpu_custom_call.1} parent=15 // pred_region
          %s158 = sand.u32 %s69, 1
          %s159 = scalar_lea.sflag [#allocation6], %s158
          %s160 = sand.u32 %s69, 1
          %s161 = smul.addr %s160, 2
          %s162 = scalar_lea.vmem [#allocation5], %s161
          %164 = vsyncadd %s159, 0
          %s165 = sadd.s32 %s25, %s24
          %s166 = smul.addr %s165, 2
          %s167 = scalar_lea.hbm %s1, %s166
          %s169 = sshll.u32 %s167, 4
          %s170 = int_to_ptr.hbm [resolvable:$true] %s169
          %s171 = sshll.u32 %s162, 4
          %s172 = int_to_ptr.vmem [resolvable:$true] %s171
          %174 = dma.hbm_to_vmem [thread:$0]  %s170, 32, %s172, %s159
        $region24: #{tpu_custom_call.1} parent=15 // pred_fallthru
          _
      $region16: #{tpu_custom_call.1} parent=5 // pred_fallthru
        _
      %p175 = scmp.le.s32.totalorder 1, %s17
      %p176 = scmp.lt.s32.totalorder %s17, 3
      %p177 = pnand %p175, %p176
      %p178 = pneg %p177
      // Predicated region
      $region25: #{tpu_custom_call.1} parent=5 // pred_check
        _
      $region26: #{tpu_custom_call.1} parent=5 // pred_check_branch
        %180 = sbr.rel (%p177) target = $region28
      $region27: #{tpu_custom_call.1} parent=5 // pred_region
        %s181 = ssub.s32 %s17, 1
        %s182 = sand.u32 %s44, 1
        %s183 = scalar_lea.sflag [#allocation3], %s182
        %s184 = sand.u32 %s44, 1
        %s185 = smul.addr %s184, 8
        %s186 = scalar_lea.vmem [#allocation2], %s185
        // Predicated region
        $region29: #{tpu_custom_call.1} parent=27 // pred_check
          %p187 = pneg %p57
        $region30: #{tpu_custom_call.1} parent=27 // pred_check_branch
          %189 = sbr.rel (%p187) target = $region32
        $region31: #{tpu_custom_call.1} parent=27 // pred_region
          %191 = dma.done %s183, 128
        $region32: #{tpu_custom_call.1} parent=27 // pred_fallthru
          _
        %s192 = sand.u32 %s72, 1
        %s193 = scalar_lea.sflag [#allocation6], %s192
        %s194 = sand.u32 %s72, 1
        %s195 = smul.addr %s194, 2
        %s196 = scalar_lea.vmem [#allocation5], %s195
        // Predicated region
        $region33: #{tpu_custom_call.1} parent=27 // pred_check
          %p197 = pneg %p85
        $region34: #{tpu_custom_call.1} parent=27 // pred_check_branch
          %199 = sbr.rel (%p197) target = $region36
        $region35: #{tpu_custom_call.1} parent=27 // pred_region
          %201 = dma.done %s193, 32
        $region36: #{tpu_custom_call.1} parent=27 // pred_fallthru
          _
        %s202 = sand.u32 %s44, 1
        %s203 = scalar_lea.sflag [#allocation3], %s202
        %s204 = sand.u32 %s44, 1
        %s205 = smul.addr %s204, 8
        %s206 = scalar_lea.vmem [#allocation2], %s205
        %p207 = pneg %p57
        %p208 = pneg %p54
        %s209 = sand.u32 %s72, 1
        %s210 = scalar_lea.sflag [#allocation6], %s209
        %s211 = sand.u32 %s72, 1
        %s212 = smul.addr %s211, 2
        %s213 = scalar_lea.vmem [#allocation5], %s212
        %p214 = pneg %p85
        %p215 = pneg %p82
        %p216 = pneg %p113
        %p217 = pneg %p110
        %s218 = sand.u32 %s100, 1
        %s219 = scalar_lea.sflag [#allocation4], %s218
        %s220 = sand.u32 %s100, 1
        %s221 = smul.addr %s220, 2
        %s222 = scalar_lea.vmem [#allocation7], %s221
        %v223 = vld [vmem:[%s196] sm:$0x3]
        %v224 = vld [vmem:[%s186] sm:$0x3]
        %s225 = scalar_lea.vmem %s186, 2 [#allocation2]
        %v226 = vld [vmem:[%s225] sm:$0x3]
        %v227 = vmax.f32 %v224, %v226
        %s228 = scalar_lea.vmem %s186, 4 [#allocation2]
        %v229 = vld [vmem:[%s228] sm:$0x3]
        %v230 = vmax.f32 %v227, %v229
        %s231 = scalar_lea.vmem %s186, 6 [#allocation2]
        %v232 = vld [vmem:[%s231] sm:$0x3]
        %v233 = vmax.f32 %v230, %v232
        %v234 = vsub.f32 %v224, %v233
        %v235 = vmul.f32 %v234, 1.442695
        %v236 = vpow.pop %v235
        %v237 = vadd.f32 %v236, 0.0
        %vm238 = vcmp.eq.s32.totalorder %v223, 0
        %v239 = vsel %vm238, %v224, 0.0
        %v240 = vsub.f32 %v226, %v233
        %v241 = vmul.f32 %v240, 1.442695
        %v242 = vpow.pop %v241
        %v243 = vadd.f32 %v237, %v242
        %vm244 = vcmp.eq.s32.totalorder %v223, 1
        %v245 = vsel %vm244, %v226, %v239
        %v246 = vsub.f32 %v229, %v233
        %v247 = vmul.f32 %v246, 1.442695
        %v248 = vpow.pop %v247
        %v249 = vadd.f32 %v243, %v248
        %vm250 = vcmp.eq.s32.totalorder %v223, 2
        %v251 = vsel %vm250, %v229, %v245
        %v252 = vsub.f32 %v232, %v233
        %v253 = vmul.f32 %v252, 1.442695
        %v254 = vpow.pop %v253
        %v255 = vadd.f32 %v249, %v254
        %vm256 = vcmp.eq.s32.totalorder %v223, 3
        %v257 = vsel %vm256, %v232, %v251
        %v258 = vlog2.pop %v255
        %v259 = vmul.f32 %v258, 0.6931472
        %v260 = vadd.f32 %v259, %v233
        %vm261 = vcmp.ne.s32.totalorder %v223, 255
        %v262 = vsub.f32 %v260, %v257
        %v263 = vsel %vm261, %v262, 0.0
        %v264 = vsel %vm261, 1.0, 0.0
        %vm265 = vcmask 1041408
        %v266 = vsel %vm265, %v263, 0.0
        %v267 = vrot.slane %v266, 4
        %v268 = vadd.f32 %v266, %v267
        %v269 = vrot.slane %v268, 2
        %v270 = vadd.f32 %v268, %v269
        %v271 = vrot.slane %v270, 1
        %v272 = vadd.f32 %v270, %v271
        %v273 = vsel %vm265, %v264, 0.0
        %v274 = vrot.slane %v273, 4
        %v275 = vadd.f32 %v273, %v274
        %v276 = vrot.slane %v275, 2
        %v277 = vadd.f32 %v275, %v276
        %v278 = vrot.slane %v277, 1
        %v279 = vadd.f32 %v277, %v278
        %v280 = vlaneseq
        %v281 = vshrl.u32 %v280, 7
        %vm282 = vcmp.eq.s32.totalorder %v281, 0
        %v283 = vsel %vm282, %v272, %v279
        %284 = vst [vmem:[%s222] sm:$0x3] %v283
        %s285 = sand.u32 %s100, 1
        %s286 = scalar_lea.sflag [#allocation4], %s285
        %s287 = sand.u32 %s100, 1
        %s288 = smul.addr %s287, 2
        %s289 = scalar_lea.vmem [#allocation7], %s288
        // Predicated region
        $region37: #{tpu_custom_call.1} parent=27 // pred_check
          %p290 = pneg %p110
        $region38: #{tpu_custom_call.1} parent=27 // pred_check_branch
          %292 = sbr.rel (%p290) target = $region40
        $region39: #{tpu_custom_call.1} parent=27 // pred_region
          %294 = vsyncadd %s286, 0
          %s295 = sadd.s32 %s27, %s26
          %s296 = smul.addr %s295, 2
          %s297 = scalar_lea.hbm %s2, %s296
          %s299 = sshll.u32 %s289, 4
          %s300 = int_to_ptr.vmem [resolvable:$true] %s299
          %s301 = sshll.u32 %s297, 4
          %s302 = int_to_ptr.hbm [resolvable:$true] %s301
          %304 = dma.vmem_to_hbm [thread:$0]  %s300, 32, %s302, %s286
        $region40: #{tpu_custom_call.1} parent=27 // pred_fallthru
          _
      $region28: #{tpu_custom_call.1} parent=5 // pred_fallthru
        _
      %p305 = scmp.le.s32.totalorder 2, %s17
      // Predicated region
      $region41: #{tpu_custom_call.1} parent=5 // pred_check
        %p306 = pneg %p305
      $region42: #{tpu_custom_call.1} parent=5 // pred_check_branch
        %308 = sbr.rel (%p306) target = $region44
      $region43: #{tpu_custom_call.1} parent=5 // pred_region
        %s309 = ssub.s32 %s17, 2
        // Predicated region
        $region45: #{tpu_custom_call.1} parent=43 // pred_check
          %p310 = pneg %p116
        $region46: #{tpu_custom_call.1} parent=43 // pred_check_branch
          %312 = sbr.rel (%p310) target = $region48
        $region47: #{tpu_custom_call.1} parent=43 // pred_region
          %s313 = sand.u32 %s101, 1
          %s314 = scalar_lea.sflag [#allocation4], %s313
          %s315 = sand.u32 %s101, 1
          %s316 = smul.addr %s315, 2
          %s317 = scalar_lea.vmem [#allocation7], %s316
          %319 = dma.done %s314, 32
        $region48: #{tpu_custom_call.1} parent=43 // pred_fallthru
          _
      $region44: #{tpu_custom_call.1} parent=5 // pred_fallthru
        _
    $region6: #{tpu_custom_call.1} parent=1 // loop_footer
      %s21 = sadd.s32 1, %s17
    $region7: #{tpu_custom_call.1} parent=1 // loop_footer_branch
      %16 = sbr.rel target = $region3
    $region8: #{tpu_custom_call.1} parent=1 // loop_exit
      _
    %320 = vsyncpa [#allocation3], 1
    %s321 = scalar_lea.sflag [#allocation3], 1
    %322 = vsyncpa %s321, 1
    %323 = vsyncpa [#allocation6], 1
    %s324 = scalar_lea.sflag [#allocation6], 1
    %325 = vsyncpa %s324, 1
    %326 = vsyncpa [#allocation4], 1
    %s327 = scalar_lea.sflag [#allocation4], 1
    %328 = vsyncpa %s327, 1

</llo_original>
